<compile_context>
chip_gen: v6e
topology: v6e:2x2x1
jax: 0.10.0
libtpu: 0.0.40
codegen_flags: <defaults>
</compile_context>

<pallas_src>
from typing import NamedTuple

import jax
import jax.numpy as jnp
from jax.experimental import pallas as pl
from jax.experimental.pallas import tpu as pltpu


def _round_up(x, m):
    return (x + m - 1) // m * m


# ----------------------------------------------------------------------------- kernel


def _make_mlp_kernel(apply_sigmoid: bool):
    def kernel(x_ref, w1_ref, b1_ref, w2_ref, b2_ref, w3_ref, b3_ref,
               w4_ref, b4_ref, o_ref):
        cdt = w1_ref.dtype
        # Layers 1..3: MXU matmuls with f32 accumulation; f32 bias + ReLU on VPU.
        h = jnp.dot(x_ref[...], w1_ref[...],
                    preferred_element_type=jnp.float32) + b1_ref[...]
        h = jnp.maximum(h, 0.0)
        h = jnp.dot(h.astype(cdt), w2_ref[...],
                    preferred_element_type=jnp.float32) + b2_ref[...]
        h = jnp.maximum(h, 0.0)
        h = jnp.dot(h.astype(cdt), w3_ref[...],
                    preferred_element_type=jnp.float32) + b3_ref[...]
        h = jnp.maximum(h, 0.0)                                   # (TB, n_h_p) f32

        # Final Linear(n_h -> 1) as w4 (1, n_h_p) contracted with h (TB, n_h_p) on
        # the hidden dim -> lane-dense (1, TB) row directly on the MXU.
        out = jax.lax.dot_general(
            w4_ref[...], h.astype(cdt),
            dimension_numbers=(((1,), (1,)), ((), ())),
            preferred_element_type=jnp.float32) + b4_ref[0]
        if apply_sigmoid:
            out = jax.nn.sigmoid(out)                             # EUP, fused
        o_ref[...] = out.astype(o_ref.dtype)

    return kernel


# ----------------------------------------------------------------------- preparation


class PreparedMLP(NamedTuple):
    w1: jax.Array
    b1: jax.Array
    w2: jax.Array
    b2: jax.Array
    w3: jax.Array
    b3: jax.Array
    w4: jax.Array   # (1, n_h_p) row
    b4: jax.Array   # (1,) f32 scalar (SMEM)
    n_in: int
    n_h: int
    n_in_p: int
    n_h_p: int


def prepare_params(params, compute_dtype=jnp.bfloat16) -> PreparedMLP:
    """Pad feature dims to 128 lanes and cast matmul weights ONCE (outside the
    per-call path).  Zero padding is exact: ReLU(0)=0 and padded w4 columns are 0.
    Biases stay f32 (added after f32 accumulation)."""
    w1, b1, w2, b2, w3, b3, w4, b4 = params
    n_in, n_h = w1.shape
    n_in_p = max(128, _round_up(n_in, 128))
    n_h_p = max(128, _round_up(n_h, 128))
    wd = jnp.dtype(compute_dtype)

    def pad2(a, r, c):
        return jnp.pad(a, ((0, r - a.shape[0]), (0, c - a.shape[1])))

    return PreparedMLP(
        w1=pad2(w1, n_in_p, n_h_p).astype(wd),
        b1=pad2(b1.reshape(1, -1), 1, n_h_p).astype(jnp.float32),
        w2=pad2(w2, n_h_p, n_h_p).astype(wd),
        b2=pad2(b2.reshape(1, -1), 1, n_h_p).astype(jnp.float32),
        w3=pad2(w3, n_h_p, n_h_p).astype(wd),
        b3=pad2(b3.reshape(1, -1), 1, n_h_p).astype(jnp.float32),
        w4=pad2(w4.reshape(1, n_h), 1, n_h_p).astype(wd),
        b4=b4.reshape(-1).astype(jnp.float32),
        n_in=n_in, n_h=n_h, n_in_p=n_in_p, n_h_p=n_h_p,
    )


# --------------------------------------------------------------------------- tiling


def _default_tile_b(B, compute_dtype):
    itemsize = jnp.dtype(compute_dtype).itemsize
    row_align = 16 if itemsize == 2 else 8          # bf16 packs 2 rows per sublane
    max_tile = 1024 if itemsize == 2 else 512       # f32 capped for v5e scoped VMEM
    if B < 256:
        return _round_up(B, row_align)              # single full-batch tile
    # >= 2 grid steps so v7x's 2 TensorCores both get work; cap padding waste.
    n_tiles = max(2, pl.cdiv(B, max_tile))
    return _round_up(pl.cdiv(B, n_tiles), 128)


def _const_spec(shape):
    """Resident block: constant index_map, single-buffered (never re-fetched)."""
    n = len(shape)
    index_map = lambda i, _n=n: (0,) * _n
    try:
        return pl.BlockSpec(shape, index_map, pipeline_mode=pl.Buffered(1))
    except TypeError:                                # older API: fall back to default
        return pl.BlockSpec(shape, index_map)


def _vmem_limit_bytes(tile_b, n_in_p, n_h_p, w_itemsize):
    x_tile = tile_b * n_in_p * w_itemsize * 2                       # double-buffered x
    weights = (n_in_p * n_h_p + 2 * n_h_p * n_h_p + n_h_p) * w_itemsize  # Buffered(1)
    biases = 3 * n_h_p * 4
    out_tile = tile_b * 4 * 2                                       # (1, TB) f32 x2
    interm = 2 * tile_b * n_h_p * 4                                 # live f32 h tiles
    est = int((x_tile + weights + biases + out_tile + interm) * 1.3)
    return min(max(est, 32 * 1024 * 1024), 64 * 1024 * 1024)


# -------------------------------------------------------------------------- wrappers


def mlp_forward(x, prep: PreparedMLP, *, tile_b=None, fuse_sigmoid=False):
    """Equivalent of torch.squeeze(MLP.network(x)) for x of shape (B, n_in)."""
    B, n_in = x.shape
    assert n_in == prep.n_in, (n_in, prep.n_in)
    n_in_p, n_h_p = prep.n_in_p, prep.n_h_p
    cdt = prep.w1.dtype

    if tile_b is None:
        tile_b = _default_tile_b(B, cdt)
    B_pad = _round_up(B, tile_b)
    # Block legality: split tiles are 128-multiples; a single tile spans the whole
    # padded batch (block dims equal to the full array dims are always legal).
    assert tile_b % 128 == 0 or tile_b == B_pad

    xp = x.astype(cdt)
    if (B_pad, n_in_p) != (B, n_in):
        xp = jnp.pad(xp, ((0, B_pad - B), (0, n_in_p - n_in)))

    grid = (B_pad // tile_b,)

    in_specs = [
        pl.BlockSpec((tile_b, n_in_p), lambda i: (i, 0)),          # x tile
        _const_spec((n_in_p, n_h_p)), _const_spec((1, n_h_p)),     # W1, b1
        _const_spec((n_h_p, n_h_p)),  _const_spec((1, n_h_p)),     # W2, b2
        _const_spec((n_h_p, n_h_p)),  _const_spec((1, n_h_p)),     # W3, b3
        _const_spec((1, n_h_p)),                                   # W4 row
        pl.BlockSpec(memory_space=pltpu.MemorySpace.SMEM),         # b4 scalar
    ]

    # TODO(synk): for very large n_h (>~2k bf16 on v7x's 64 MiB VMEM even with
    # single-buffered weights), add an "arbitrary" K grid axis with an f32 VMEM
    # accumulator instead of keeping full (n_h_p, n_h_p) weight blocks resident.
    out = pl.pallas_call(
        _make_mlp_kernel(fuse_sigmoid),
        out_shape=jax.ShapeDtypeStruct((1, B_pad), jnp.float32),
        grid_spec=pltpu.PrefetchScalarGridSpec(
            num_scalar_prefetch=0,
            grid=grid,
            in_specs=in_specs,
            out_specs=pl.BlockSpec((1, tile_b), lambda i: (0, i)),  # lane-dense
        ),
        compiler_params=pltpu.CompilerParams(
            dimension_semantics=("parallel",),
            vmem_limit_bytes=_vmem_limit_bytes(
                tile_b, n_in_p, n_h_p, jnp.dtype(cdt).itemsize),
        ),
    )(xp, prep.w1, prep.b1, prep.w2, prep.b2, prep.w3, prep.b3, prep.w4, prep.b4)

    # torch.squeeze(self.network(x)): (B, 1) -> (B,) (scalar if B == 1).
    return jnp.squeeze(out[:, :B])


def mlp_estimate(x, prep: PreparedMLP, **kw):
    # sigmoid fused into the kernel tail (EUP), no second pass over HBM.
    return mlp_forward(x, prep, fuse_sigmoid=True, **kw)


# ----------------------------------------------------------------------------- setup


def init_params(key, n_in, n_h, dtype=jnp.float32):
    """Deterministic init mimicking nn.Linear shapes; stored as (in, out)."""
    ks = jax.random.split(key, 8)

    def lin(kw, kb, fan_in, fan_out):
        bound = 1.0 / jnp.sqrt(fan_in)
        w = jax.random.uniform(kw, (fan_in, fan_out), dtype, -bound, bound)
        b = jax.random.uniform(kb, (1, fan_out), dtype, -bound, bound)
        return w, b

    w1, b1 = lin(ks[0], ks[1], n_in, n_h)
    w2, b2 = lin(ks[2], ks[3], n_h, n_h)
    w3, b3 = lin(ks[4], ks[5], n_h, n_h)
    w4, b4 = lin(ks[6], ks[7], n_h, 1)
    return (w1, b1, w2, b2, w3, b3, w4, b4)


def _reference(x, params):
    w1, b1, w2, b2, w3, b3, w4, b4 = params
    h = jnp.maximum(x @ w1 + b1, 0.0)
    h = jnp.maximum(h @ w2 + b2, 0.0)
    h = jnp.maximum(h @ w3 + b3, 0.0)
    return jnp.squeeze(h @ w4 + b4, axis=-1)


if __name__ == "__main__":
    key = jax.random.PRNGKey(0)
    kx, kx2, kp = jax.random.split(key, 3)

    B, n_in, n_h = 8, 16, 32
    x = jax.random.normal(kx, (B, n_in), jnp.float32)
    params = init_params(kp, n_in, n_h)
    ref = _reference(x, params)

    # Default bf16 compute path (weights padded + cast once).
    prep_bf16 = prepare_params(params)                       # bf16 default
    y = jax.block_until_ready(mlp_forward(x, prep_bf16))
    p = jax.block_until_ready(mlp_estimate(x, prep_bf16))
    assert y.shape == (B,)
    assert jnp.allclose(y, ref, atol=5e-2, rtol=5e-2)
    assert jnp.allclose(p, jax.nn.sigmoid(ref), atol=5e-2, rtol=5e-2)

    # Exact f32 compute path.
    prep_f32 = prepare_params(params, compute_dtype=jnp.float32)
    y32 = jax.block_until_ready(mlp_forward(x, prep_f32))
    p32 = jax.block_until_ready(mlp_estimate(x, prep_f32))
    assert jnp.allclose(y32, ref, atol=1e-5, rtol=1e-5)
    assert jnp.allclose(p32, jax.nn.sigmoid(ref), atol=1e-5, rtol=1e-5)

    # Multi-tile batch path (grid > 1, batch padding sliced off).
    B2 = 384
    x2 = jax.random.normal(kx2, (B2, n_in), jnp.float32)
    ref2 = _reference(x2, params)
    y2 = jax.block_until_ready(mlp_forward(x2, prep_bf16))
    assert y2.shape == (B2,)
    assert jnp.allclose(y2, ref2, atol=5e-2, rtol=5e-2)

    print("KERNEL_OK")
</pallas_src>

<mosaic_0001>
module attributes {stable_mosaic.version = 11 : i64} {
  func.func @kernel(%arg0: i32, %arg1: memref<16x128xbf16, #tpu.memory_space<vmem>>, %arg2: memref<128x128xbf16, #tpu.memory_space<vmem>>, %arg3: memref<1x128xf32, #tpu.memory_space<vmem>>, %arg4: memref<128x128xbf16, #tpu.memory_space<vmem>>, %arg5: memref<1x128xf32, #tpu.memory_space<vmem>>, %arg6: memref<128x128xbf16, #tpu.memory_space<vmem>>, %arg7: memref<1x128xf32, #tpu.memory_space<vmem>>, %arg8: memref<1x128xbf16, #tpu.memory_space<vmem>>, %arg9: memref<1xf32, #tpu.memory_space<smem>>, %arg10: memref<1x16xf32, #tpu.memory_space<vmem>>) attributes {dimension_semantics = [#tpu.dimension_semantics<parallel>], iteration_bounds = array<i64: 1>, scalar_prefetch = 0 : i64, scratch_operands = 0 : i64, tpu.core_type = #tpu.core_type<tc>, window_params = [{transform_indices = @transform_0, window_bounds = array<i64: 16, 128>}, {pipeline_mode = #tpu.pipeline_mode<synchronous>, transform_indices = @transform_1, window_bounds = array<i64: 128, 128>}, {pipeline_mode = #tpu.pipeline_mode<synchronous>, transform_indices = @transform_2, window_bounds = array<i64: 1, 128>}, {pipeline_mode = #tpu.pipeline_mode<synchronous>, transform_indices = @transform_3, window_bounds = array<i64: 128, 128>}, {pipeline_mode = #tpu.pipeline_mode<synchronous>, transform_indices = @transform_4, window_bounds = array<i64: 1, 128>}, {pipeline_mode = #tpu.pipeline_mode<synchronous>, transform_indices = @transform_5, window_bounds = array<i64: 128, 128>}, {pipeline_mode = #tpu.pipeline_mode<synchronous>, transform_indices = @transform_6, window_bounds = array<i64: 1, 128>}, {pipeline_mode = #tpu.pipeline_mode<synchronous>, transform_indices = @transform_7, window_bounds = array<i64: 1, 128>}, {transform_indices = @transform_8, window_bounds = array<i64: 1>}, {transform_indices = @transform_9, window_bounds = array<i64: 1, 16>}]} {
    %c0 = arith.constant 0 : index
    %c0_0 = arith.constant 0 : index
    %0 = vector.load %arg1[%c0, %c0_0] : memref<16x128xbf16, #tpu.memory_space<vmem>>, vector<16x128xbf16>
    %c0_1 = arith.constant 0 : index
    %c0_2 = arith.constant 0 : index
    %1 = vector.load %arg2[%c0_1, %c0_2] : memref<128x128xbf16, #tpu.memory_space<vmem>>, vector<128x128xbf16>
    %cst = arith.constant dense<0.000000e+00> : vector<16x128xf32>
    %2 = tpu.matmul %0, %1, %cst {dimension_numbers = #tpu.dot_dimension_numbers<[1], [0], [0], [1], [0, 0, 1, 1], [], []>} : vector<16x128xbf16>, vector<128x128xbf16>, vector<16x128xf32> -> vector<16x128xf32>
    %c0_3 = arith.constant 0 : index
    %c0_4 = arith.constant 0 : index
    %3 = vector.load %arg3[%c0_3, %c0_4] : memref<1x128xf32, #tpu.memory_space<vmem>>, vector<1x128xf32>
    %4 = vector.broadcast %3 : vector<1x128xf32> to vector<16x128xf32>
    %5 = arith.addf %2, %4 : vector<16x128xf32>
    %cst_5 = arith.constant 0.000000e+00 : f32
    %6 = vector.broadcast %cst_5 : f32 to vector<16x128xf32>
    %7 = arith.maximumf %5, %6 : vector<16x128xf32>
    %8 = arith.truncf %7 : vector<16x128xf32> to vector<16x128xbf16>
    %c0_6 = arith.constant 0 : index
    %c0_7 = arith.constant 0 : index
    %9 = vector.load %arg4[%c0_6, %c0_7] : memref<128x128xbf16, #tpu.memory_space<vmem>>, vector<128x128xbf16>
    %cst_8 = arith.constant dense<0.000000e+00> : vector<16x128xf32>
    %10 = tpu.matmul %8, %9, %cst_8 {dimension_numbers = #tpu.dot_dimension_numbers<[1], [0], [0], [1], [0, 0, 1, 1], [], []>} : vector<16x128xbf16>, vector<128x128xbf16>, vector<16x128xf32> -> vector<16x128xf32>
    %c0_9 = arith.constant 0 : index
    %c0_10 = arith.constant 0 : index
    %11 = vector.load %arg5[%c0_9, %c0_10] : memref<1x128xf32, #tpu.memory_space<vmem>>, vector<1x128xf32>
    %12 = vector.broadcast %11 : vector<1x128xf32> to vector<16x128xf32>
    %13 = arith.addf %10, %12 : vector<16x128xf32>
    %cst_11 = arith.constant 0.000000e+00 : f32
    %14 = vector.broadcast %cst_11 : f32 to vector<16x128xf32>
    %15 = arith.maximumf %13, %14 : vector<16x128xf32>
    %16 = arith.truncf %15 : vector<16x128xf32> to vector<16x128xbf16>
    %c0_12 = arith.constant 0 : index
    %c0_13 = arith.constant 0 : index
    %17 = vector.load %arg6[%c0_12, %c0_13] : memref<128x128xbf16, #tpu.memory_space<vmem>>, vector<128x128xbf16>
    %cst_14 = arith.constant dense<0.000000e+00> : vector<16x128xf32>
    %18 = tpu.matmul %16, %17, %cst_14 {dimension_numbers = #tpu.dot_dimension_numbers<[1], [0], [0], [1], [0, 0, 1, 1], [], []>} : vector<16x128xbf16>, vector<128x128xbf16>, vector<16x128xf32> -> vector<16x128xf32>
    %c0_15 = arith.constant 0 : index
    %c0_16 = arith.constant 0 : index
    %19 = vector.load %arg7[%c0_15, %c0_16] : memref<1x128xf32, #tpu.memory_space<vmem>>, vector<1x128xf32>
    %20 = vector.broadcast %19 : vector<1x128xf32> to vector<16x128xf32>
    %21 = arith.addf %18, %20 : vector<16x128xf32>
    %cst_17 = arith.constant 0.000000e+00 : f32
    %22 = vector.broadcast %cst_17 : f32 to vector<16x128xf32>
    %23 = arith.maximumf %21, %22 : vector<16x128xf32>
    %c0_18 = arith.constant 0 : index
    %c0_19 = arith.constant 0 : index
    %24 = vector.load %arg8[%c0_18, %c0_19] : memref<1x128xbf16, #tpu.memory_space<vmem>>, vector<1x128xbf16>
    %25 = arith.truncf %23 : vector<16x128xf32> to vector<16x128xbf16>
    %cst_20 = arith.constant dense<0.000000e+00> : vector<1x16xf32>
    %26 = tpu.matmul %24, %25, %cst_20 {dimension_numbers = #tpu.dot_dimension_numbers<[1], [1], [0], [0], [0, 0, 1, 0], [], []>} : vector<1x128xbf16>, vector<16x128xbf16>, vector<1x16xf32> -> vector<1x16xf32>
    %c0_21 = arith.constant 0 : index
    %27 = memref.load %arg9[%c0_21] : memref<1xf32, #tpu.memory_space<smem>>
    %28 = vector.broadcast %27 : f32 to vector<1x16xf32>
    %29 = arith.addf %26, %28 : vector<1x16xf32>
    %c0_22 = arith.constant 0 : index
    %c0_23 = arith.constant 0 : index
    %30 = vector.load %arg10[%c0_22, %c0_23] : memref<1x16xf32, #tpu.memory_space<vmem>>, vector<1x16xf32>
    tpu.vector_store %arg10[%c0_22, %c0_23], %29 {strides = array<i32>} : memref<1x16xf32, #tpu.memory_space<vmem>>, vector<1x16xf32>,
    return
  }
  func.func @transform_0(%arg0: i32) -> (i32, i32) {
    %c0_i32 = arith.constant 0 : i32
    %c0_i32_0 = arith.constant 0 : i32
    return %arg0, %c0_i32 : i32, i32
  }
  func.func @transform_1(%arg0: i32) -> (i32, i32) {
    %c0_i32 = arith.constant 0 : i32
    %c0_i32_0 = arith.constant 0 : i32
    %c0_i32_1 = arith.constant 0 : i32
    return %c0_i32, %c0_i32_0 : i32, i32
  }
  func.func @transform_2(%arg0: i32) -> (i32, i32) {
    %c0_i32 = arith.constant 0 : i32
    %c0_i32_0 = arith.constant 0 : i32
    %c0_i32_1 = arith.constant 0 : i32
    return %c0_i32, %c0_i32_0 : i32, i32
  }
  func.func @transform_3(%arg0: i32) -> (i32, i32) {
    %c0_i32 = arith.constant 0 : i32
    %c0_i32_0 = arith.constant 0 : i32
    %c0_i32_1 = arith.constant 0 : i32
    return %c0_i32, %c0_i32_0 : i32, i32
  }
  func.func @transform_4(%arg0: i32) -> (i32, i32) {
    %c0_i32 = arith.constant 0 : i32
    %c0_i32_0 = arith.constant 0 : i32
    %c0_i32_1 = arith.constant 0 : i32
    return %c0_i32, %c0_i32_0 : i32, i32
  }
  func.func @transform_5(%arg0: i32) -> (i32, i32) {
    %c0_i32 = arith.constant 0 : i32
    %c0_i32_0 = arith.constant 0 : i32
    %c0_i32_1 = arith.constant 0 : i32
    return %c0_i32, %c0_i32_0 : i32, i32
  }
  func.func @transform_6(%arg0: i32) -> (i32, i32) {
    %c0_i32 = arith.constant 0 : i32
    %c0_i32_0 = arith.constant 0 : i32
    %c0_i32_1 = arith.constant 0 : i32
    return %c0_i32, %c0_i32_0 : i32, i32
  }
  func.func @transform_7(%arg0: i32) -> (i32, i32) {
    %c0_i32 = arith.constant 0 : i32
    %c0_i32_0 = arith.constant 0 : i32
    %c0_i32_1 = arith.constant 0 : i32
    return %c0_i32, %c0_i32_0 : i32, i32
  }
  func.func @transform_8(%arg0: i32) -> i32 {
    %c0_i32 = arith.constant 0 : i32
    %c0_i32_0 = arith.constant 0 : i32
    return %c0_i32 : i32
  }
  func.func @transform_9(%arg0: i32) -> (i32, i32) {
    %c0_i32 = arith.constant 0 : i32
    %c0_i32_0 = arith.constant 0 : i32
    return %c0_i32, %arg0 : i32, i32
  }
}

</mosaic_0001>

<llo_original>
// kernel: tpu_custom_call.1
$region0: #{tpu_custom_call.1}
  #allocation0 [shape = 'u32[]', space=smem, size = 0x4, offset = 0x4, fixed_abs, tag = 'smem constant byte address 0x4 - core index']
  #allocation1 [shape = 'u32[144,128]{1,0:T(1,128)}', space=vmem, size = 0x12000, scoped, tag = 'internal scratch']
  #allocation2 [shape = 'f32[1]{0:T(128)S(6)}', space=smem, size = 0x200, scoped, tag = 'scoped memory for tpu_custom_call.1']
  %s0 = inlined_call_operand.hbm [shape: bf16[16,128], index: 0, kind: input, shape index: {}]
  %s1 = inlined_call_operand.hbm [shape: bf16[128,128], index: 1, kind: input, shape index: {}]
  %s2 = inlined_call_operand.vmem [shape: f32[1,128], index: 2, kind: input, shape index: {}]
  %s3 = inlined_call_operand.hbm [shape: bf16[128,128], index: 3, kind: input, shape index: {}]
  %s4 = inlined_call_operand.vmem [shape: f32[1,128], index: 4, kind: input, shape index: {}]
  %s5 = inlined_call_operand.hbm [shape: bf16[128,128], index: 5, kind: input, shape index: {}]
  %s6 = inlined_call_operand.vmem [shape: f32[1,128], index: 6, kind: input, shape index: {}]
  %s7 = inlined_call_operand.vmem [shape: bf16[1,128], index: 7, kind: input, shape index: {}]
  %s8 = inlined_call_operand.<no memory space> [shape: f32[1], index: 8, kind: input, shape index: {}]
  %s9 = inlined_call_operand.hbm [shape: f32[1,16], index: 9, kind: output, shape index: {}]
  %s10 = sld [smem:[#allocation0]]
  $region62: #{tpu_custom_call.1} parent=0
    _
  %s12 = ssub.s32 1, %s10
  %s13 = scalar_select 0, %s12, %s10
  %14 = sst [smem:[#allocation2]] %s8
  $region1: #{tpu_custom_call.1} parent=0
    #allocation3 [shape = 'u8[4096]{0}', space=vmem, size = 0x1000, scoped, tag = 'input window, operand 0, single buffered']
    #allocation4 [shape = 's32[1]{0}', space=sflag, size = 0x4, scoped, tag = 'scoped memory for tpu_custom_call.1']
    #allocation5 [shape = 's32[1]{0}', space=sflag, size = 0x4, scoped, tag = 'scoped memory for tpu_custom_call.1']
    #allocation6 [shape = 'u8[32768]{0}', space=vmem, size = 0x8000, scoped, tag = 'input window, operand 1, single buffered']
    #allocation7 [shape = 's32[1]{0}', space=sflag, size = 0x4, scoped, tag = 'scoped memory for tpu_custom_call.1']
    #allocation8 [shape = 'u8[32768]{0}', space=vmem, size = 0x8000, scoped, tag = 'input window, operand 3, single buffered']
    #allocation9 [shape = 'u8[32768]{0}', space=vmem, size = 0x8000, scoped, tag = 'input window, operand 5, single buffered']
    #allocation10 [shape = 's32[1]{0}', space=sflag, size = 0x4, scoped, tag = 'scoped memory for tpu_custom_call.1']
    #allocation11 [shape = 'u8[512]{0}', space=vmem, size = 0x400, scoped, tag = 'output window, operand 0, single buffered']
    %15 = vsyncpa [#allocation4], 0
    %16 = vsyncpa [#allocation7], 0
    %17 = vsyncpa [#allocation10], 0
    %18 = vsyncpa [#allocation5], 0
    // Predicated region
    $region2: #{tpu_custom_call.1} parent=1 // pred_check
      _
    $region3: #{tpu_custom_call.1} parent=1 // pred_check_branch
      %20 = sbr.rel (0) target = $region5
    $region4: #{tpu_custom_call.1} parent=1 // pred_region
      %s22 = ssub.s32 128, 128
      %23 = vsyncadd [#allocation4], %s22
      %s24 = sshll.u32 [#allocation3], 4
      %s25 = int_to_ptr.vmem [resolvable:$true] %s24
      %30 = dma.hbm_to_vmem [thread:$0]  %s0, 128, %s25, [#allocation4], 64, 64, 4
    $region5: #{tpu_custom_call.1} parent=1 // pred_fallthru
      _
    // Predicated region
    $region6: #{tpu_custom_call.1} parent=1 // pred_check
      _
    $region7: #{tpu_custom_call.1} parent=1 // pred_check_branch
      %32 = sbr.rel (0) target = $region9
    $region8: #{tpu_custom_call.1} parent=1 // pred_region
      %s34 = ssub.s32 1024, 1024
      %35 = vsyncadd [#allocation7], %s34
      %s36 = sshll.u32 [#allocation6], 4
      %s37 = int_to_ptr.vmem [resolvable:$true] %s36
      %42 = dma.hbm_to_vmem [thread:$0]  %s1, 1024, %s37, [#allocation7], 64, 64, 4
    $region9: #{tpu_custom_call.1} parent=1 // pred_fallthru
      _
    // Predicated region
    $region10: #{tpu_custom_call.1} parent=1 // pred_check
      _
    $region11: #{tpu_custom_call.1} parent=1 // pred_check_branch
      %44 = sbr.rel (0) target = $region13
    $region12: #{tpu_custom_call.1} parent=1 // pred_region
      _
    $region13: #{tpu_custom_call.1} parent=1 // pred_fallthru
      _
    // Predicated region
    $region14: #{tpu_custom_call.1} parent=1 // pred_check
      _
    $region15: #{tpu_custom_call.1} parent=1 // pred_check_branch
      %46 = sbr.rel (0) target = $region17
    $region16: #{tpu_custom_call.1} parent=1 // pred_region
      %s48 = ssub.s32 1024, 1024
      %49 = vsyncadd [#allocation7], %s48
      %s50 = sshll.u32 [#allocation8], 4
      %s51 = int_to_ptr.vmem [resolvable:$true] %s50
      %56 = dma.hbm_to_vmem [thread:$0]  %s3, 1024, %s51, [#allocation7], 64, 64, 4
    $region17: #{tpu_custom_call.1} parent=1 // pred_fallthru
      _
    // Predicated region
    $region18: #{tpu_custom_call.1} parent=1 // pred_check
      _
    $region19: #{tpu_custom_call.1} parent=1 // pred_check_branch
      %58 = sbr.rel (0) target = $region21
    $region20: #{tpu_custom_call.1} parent=1 // pred_region
      _
    $region21: #{tpu_custom_call.1} parent=1 // pred_fallthru
      _
    // Predicated region
    $region22: #{tpu_custom_call.1} parent=1 // pred_check
      _
    $region23: #{tpu_custom_call.1} parent=1 // pred_check_branch
      %60 = sbr.rel (0) target = $region25
    $region24: #{tpu_custom_call.1} parent=1 // pred_region
      %s62 = ssub.s32 1024, 1024
      %63 = vsyncadd [#allocation10], %s62
      %s64 = sshll.u32 [#allocation9], 4
      %s65 = int_to_ptr.vmem [resolvable:$true] %s64
      %70 = dma.hbm_to_vmem [thread:$0]  %s5, 1024, %s65, [#allocation10], 64, 64, 4
    $region25: #{tpu_custom_call.1} parent=1 // pred_fallthru
      _
    // Predicated region
    $region26: #{tpu_custom_call.1} parent=1 // pred_check
      _
    $region27: #{tpu_custom_call.1} parent=1 // pred_check_branch
      %72 = sbr.rel (0) target = $region29
    $region28: #{tpu_custom_call.1} parent=1 // pred_region
      _
    $region29: #{tpu_custom_call.1} parent=1 // pred_fallthru
      _
    // Predicated region
    $region30: #{tpu_custom_call.1} parent=1 // pred_check
      _
    $region31: #{tpu_custom_call.1} parent=1 // pred_check_branch
      %74 = sbr.rel (0) target = $region33
    $region32: #{tpu_custom_call.1} parent=1 // pred_region
      _
    $region33: #{tpu_custom_call.1} parent=1 // pred_fallthru
      _
    // Predicated region
    $region34: #{tpu_custom_call.1} parent=1 // pred_check
      _
    $region35: #{tpu_custom_call.1} parent=1 // pred_check_branch
      %76 = sbr.rel (0) target = $region37
    $region36: #{tpu_custom_call.1} parent=1 // pred_region
      _
    $region37: #{tpu_custom_call.1} parent=1 // pred_fallthru
      _
    // Predicated region
    $region38: #{tpu_custom_call.1} parent=1 // pred_check
      _
    $region39: #{tpu_custom_call.1} parent=1 // pred_check_branch
      %78 = sbr.rel (0) target = $region41
    $region40: #{tpu_custom_call.1} parent=1 // pred_region
      %79 = dma.done [#allocation4], 128
    $region41: #{tpu_custom_call.1} parent=1 // pred_fallthru
      _
    // Predicated region
    $region42: #{tpu_custom_call.1} parent=1 // pred_check
      _
    $region43: #{tpu_custom_call.1} parent=1 // pred_check_branch
      %81 = sbr.rel (0) target = $region45
    $region44: #{tpu_custom_call.1} parent=1 // pred_region
      %82 = dma.done [#allocation7], 1024
    $region45: #{tpu_custom_call.1} parent=1 // pred_fallthru
      _
    // Predicated region
    $region46: #{tpu_custom_call.1} parent=1 // pred_check
      _
    $region47: #{tpu_custom_call.1} parent=1 // pred_check_branch
      %84 = sbr.rel (0) target = $region49
    $region48: #{tpu_custom_call.1} parent=1 // pred_region
      %85 = dma.done [#allocation7], 1024
    $region49: #{tpu_custom_call.1} parent=1 // pred_fallthru
      _
    // Predicated region
    $region50: #{tpu_custom_call.1} parent=1 // pred_check
      _
    $region51: #{tpu_custom_call.1} parent=1 // pred_check_branch
      %87 = sbr.rel (0) target = $region53
    $region52: #{tpu_custom_call.1} parent=1 // pred_region
      %88 = dma.done [#allocation10], 1024
    $region53: #{tpu_custom_call.1} parent=1 // pred_fallthru
      _
    %v90 = vld [vmem:[#allocation3] sm:$0xf]
    %v91 = vld [vmem:[#allocation3 + $0x4] sm:$0xf]
    %v92 = vld [vmem:[#allocation6] sm:$0xf]
    %v93 = vld [vmem:[#allocation6 + $0x4] sm:$0xf]
    %v94 = vld [vmem:[#allocation6 + $0x8] sm:$0xf]
    %v95 = vld [vmem:[#allocation6 + $0xc] sm:$0xf]
    %v96 = vld [vmem:[#allocation6 + $0x10] sm:$0xf]
    %v97 = vld [vmem:[#allocation6 + $0x14] sm:$0xf]
    %v98 = vld [vmem:[#allocation6 + $0x18] sm:$0xf]
    %v99 = vld [vmem:[#allocation6 + $0x1c] sm:$0xf]
    %v100 = vld [vmem:[#allocation6 + $0x20] sm:$0xf]
    %v101 = vld [vmem:[#allocation6 + $0x24] sm:$0xf]
    %v102 = vld [vmem:[#allocation6 + $0x28] sm:$0xf]
    %v103 = vld [vmem:[#allocation6 + $0x2c] sm:$0xf]
    %v104 = vld [vmem:[#allocation6 + $0x30] sm:$0xf]
    %v105 = vld [vmem:[#allocation6 + $0x34] sm:$0xf]
    %v106 = vld [vmem:[#allocation6 + $0x38] sm:$0xf]
    %v107 = vld [vmem:[#allocation6 + $0x3c] sm:$0xf]
    %v108 = vld [vmem:[%s2] sm:$0x1]
    %v110 = vlaneseq
    %v111 = vshrl.u32 %v110, 7
    %v112 = vsub.s32 0, %v111
    %v113 = vrot.slane %v108, %v112
    %v117 = vunpack.c.l.b16 %v90
    %v118 = vunpack.c.l.b16 %v91
    %v119 = vpack.c.b16 %v118, %v117
    %v137 = vunpack.c.l.b16 %v92
    %v138 = vunpack.c.l.b16 %v93
    %v139 = vunpack.c.l.b16 %v94
    %v140 = vunpack.c.l.b16 %v95
    %v141 = vunpack.c.l.b16 %v96
    %v142 = vunpack.c.l.b16 %v97
    %v143 = vunpack.c.l.b16 %v98
    %v144 = vunpack.c.l.b16 %v99
    %v145 = vunpack.c.l.b16 %v100
    %v146 = vunpack.c.l.b16 %v101
    %v147 = vunpack.c.l.b16 %v102
    %v148 = vunpack.c.l.b16 %v103
    %v149 = vunpack.c.l.b16 %v104
    %v150 = vunpack.c.l.b16 %v105
    %v151 = vunpack.c.l.b16 %v106
    %v152 = vunpack.c.l.b16 %v107
    %v153 = vpack.c.b16 %v138, %v137
    %v154 = vpack.c.b16 %v140, %v139
    %v155 = vpack.c.b16 %v142, %v141
    %v156 = vpack.c.b16 %v144, %v143
    %v157 = vpack.c.b16 %v146, %v145
    %v158 = vpack.c.b16 %v148, %v147
    %v159 = vpack.c.b16 %v150, %v149
    %v160 = vpack.c.b16 %v152, %v151
    %169 = vmatprep.subr.bf16.mxu0 0
    %170 = vmatpush1.bf16.msra.mxu0 %v160
    %171 = vmatprep.subr.bf16.mxu0 0
    %172 = vmatpush1.bf16.msra.mxu0 %v159
    %173 = vmatprep.subr.bf16.mxu0 0
    %174 = vmatpush1.bf16.msra.mxu0 %v158
    %175 = vmatprep.subr.bf16.mxu0 0
    %176 = vmatpush1.bf16.msra.mxu0 %v157
    %177 = vmatprep.subr.bf16.mxu0 0
    %178 = vmatpush1.bf16.msra.mxu0 %v156
    %179 = vmatprep.subr.bf16.mxu0 0
    %180 = vmatpush1.bf16.msra.mxu0 %v155
    %181 = vmatprep.subr.bf16.mxu0 0
    %182 = vmatpush1.bf16.msra.mxu0 %v154
    %183 = vmatprep.subr.bf16.mxu0 0
    %184 = vmatpush1.bf16.msra.mxu0 %v153
    %185 = vmatprep.subr.bf16.mxu0 0
    %186 = vmatpush2.bf16.msra.mxu0 0
    %187 = vmatprep.subr.bf16.mxu0 0
    %188 = vmatpush2.bf16.msra.mxu0 0
    %189 = vmatprep.subr.bf16.mxu0 0
    %190 = vmatpush2.bf16.msra.mxu0 0
    %191 = vmatprep.subr.bf16.mxu0 0
    %192 = vmatpush2.bf16.msra.mxu0 0
    %193 = vmatprep.subr.bf16.mxu0 0
    %194 = vmatpush2.bf16.msra.mxu0 0
    %195 = vmatprep.subr.bf16.mxu0 0
    %196 = vmatpush2.bf16.msra.mxu0 0
    %197 = vmatprep.subr.bf16.mxu0 0
    %198 = vmatpush2.bf16.msra.mxu0 0
    %199 = vmatprep.subr.bf16.mxu0 0
    %200 = vmatpush2.bf16.msra.mxu0 0
    %201 = vmatprep.mubr.bf16.mxu0 0
    %202 = vmatmul.mubr.bf16.gmra.mxu0 %v119
    %v203 = vpop.f32.mrf.mxu0
    %v204 = vadd.f32 %v113, %v203
    %v205 = vpop.f32.mrf.mxu0
    %v206 = vpop.f32.mrf.mxu0
    %v207 = vadd.f32 %v113, %v206
    %v208 = vpop.f32.mrf.mxu0
    %209 = vdwg.mxu0
    %v210 = vmax.f32 %v204, 0.0
    %v211 = vmax.f32 %v207, 0.0
    %v212 = vpack.c.bf16 %v211, %v210
    %v213 = vld [vmem:[#allocation8] sm:$0xf]
    %v214 = vld [vmem:[#allocation8 + $0x4] sm:$0xf]
    %v215 = vld [vmem:[#allocation8 + $0x8] sm:$0xf]
    %v216 = vld [vmem:[#allocation8 + $0xc] sm:$0xf]
    %v217 = vld [vmem:[#allocation8 + $0x10] sm:$0xf]
    %v218 = vld [vmem:[#allocation8 + $0x14] sm:$0xf]
    %v219 = vld [vmem:[#allocation8 + $0x18] sm:$0xf]
    %v220 = vld [vmem:[#allocation8 + $0x1c] sm:$0xf]
    %v221 = vld [vmem:[#allocation8 + $0x20] sm:$0xf]
    %v222 = vld [vmem:[#allocation8 + $0x24] sm:$0xf]
    %v223 = vld [vmem:[#allocation8 + $0x28] sm:$0xf]
    %v224 = vld [vmem:[#allocation8 + $0x2c] sm:$0xf]
    %v225 = vld [vmem:[#allocation8 + $0x30] sm:$0xf]
    %v226 = vld [vmem:[#allocation8 + $0x34] sm:$0xf]
    %v227 = vld [vmem:[#allocation8 + $0x38] sm:$0xf]
    %v228 = vld [vmem:[#allocation8 + $0x3c] sm:$0xf]
    %v229 = vld [vmem:[%s4] sm:$0x1]
    %v231 = vlaneseq
    %v232 = vshrl.u32 %v231, 7
    %v233 = vsub.s32 0, %v232
    %v234 = vrot.slane %v229, %v233
    %v252 = vunpack.c.l.b16 %v213
    %v253 = vunpack.c.l.b16 %v214
    %v254 = vunpack.c.l.b16 %v215
    %v255 = vunpack.c.l.b16 %v216
    %v256 = vunpack.c.l.b16 %v217
    %v257 = vunpack.c.l.b16 %v218
    %v258 = vunpack.c.l.b16 %v219
    %v259 = vunpack.c.l.b16 %v220
    %v260 = vunpack.c.l.b16 %v221
    %v261 = vunpack.c.l.b16 %v222
    %v262 = vunpack.c.l.b16 %v223
    %v263 = vunpack.c.l.b16 %v224
    %v264 = vunpack.c.l.b16 %v225
    %v265 = vunpack.c.l.b16 %v226
    %v266 = vunpack.c.l.b16 %v227
    %v267 = vunpack.c.l.b16 %v228
    %v268 = vpack.c.b16 %v253, %v252
    %v269 = vpack.c.b16 %v255, %v254
    %v270 = vpack.c.b16 %v257, %v256
    %v271 = vpack.c.b16 %v259, %v258
    %v272 = vpack.c.b16 %v261, %v260
    %v273 = vpack.c.b16 %v263, %v262
    %v274 = vpack.c.b16 %v265, %v264
    %v275 = vpack.c.b16 %v267, %v266
    %284 = vmatprep.subr.bf16.mxu0 0
    %285 = vmatpush1.bf16.msra.mxu0 %v275
    %286 = vmatprep.subr.bf16.mxu0 0
    %287 = vmatpush1.bf16.msra.mxu0 %v274
    %288 = vmatprep.subr.bf16.mxu0 0
    %289 = vmatpush1.bf16.msra.mxu0 %v273
    %290 = vmatprep.subr.bf16.mxu0 0
    %291 = vmatpush1.bf16.msra.mxu0 %v272
    %292 = vmatprep.subr.bf16.mxu0 0
    %293 = vmatpush1.bf16.msra.mxu0 %v271
    %294 = vmatprep.subr.bf16.mxu0 0
    %295 = vmatpush1.bf16.msra.mxu0 %v270
    %296 = vmatprep.subr.bf16.mxu0 0
    %297 = vmatpush1.bf16.msra.mxu0 %v269
    %298 = vmatprep.subr.bf16.mxu0 0
    %299 = vmatpush1.bf16.msra.mxu0 %v268
    %300 = vmatprep.subr.bf16.mxu0 0
    %301 = vmatpush2.bf16.msra.mxu0 0
    %302 = vmatprep.subr.bf16.mxu0 0
    %303 = vmatpush2.bf16.msra.mxu0 0
    %304 = vmatprep.subr.bf16.mxu0 0
    %305 = vmatpush2.bf16.msra.mxu0 0
    %306 = vmatprep.subr.bf16.mxu0 0
    %307 = vmatpush2.bf16.msra.mxu0 0
    %308 = vmatprep.subr.bf16.mxu0 0
    %309 = vmatpush2.bf16.msra.mxu0 0
    %310 = vmatprep.subr.bf16.mxu0 0
    %311 = vmatpush2.bf16.msra.mxu0 0
    %312 = vmatprep.subr.bf16.mxu0 0
    %313 = vmatpush2.bf16.msra.mxu0 0
    %314 = vmatprep.subr.bf16.mxu0 0
    %315 = vmatpush2.bf16.msra.mxu0 0
    %316 = vmatprep.mubr.bf16.mxu0 0
    %317 = vmatmul.mubr.bf16.gmra.mxu0 %v212
    %v318 = vpop.f32.mrf.mxu0
    %v319 = vadd.f32 %v234, %v318
    %v320 = vpop.f32.mrf.mxu0
    %v321 = vpop.f32.mrf.mxu0
    %v322 = vadd.f32 %v234, %v321
    %v323 = vpop.f32.mrf.mxu0
    %324 = vdwg.mxu0
    %v325 = vmax.f32 %v319, 0.0
    %v326 = vmax.f32 %v322, 0.0
    %v327 = vpack.c.bf16 %v326, %v325
    %v328 = vld [vmem:[#allocation9] sm:$0xf]
    %v329 = vld [vmem:[#allocation9 + $0x4] sm:$0xf]
    %v330 = vld [vmem:[#allocation9 + $0x8] sm:$0xf]
    %v331 = vld [vmem:[#allocation9 + $0xc] sm:$0xf]
    %v332 = vld [vmem:[#allocation9 + $0x10] sm:$0xf]
    %v333 = vld [vmem:[#allocation9 + $0x14] sm:$0xf]
    %v334 = vld [vmem:[#allocation9 + $0x18] sm:$0xf]
    %v335 = vld [vmem:[#allocation9 + $0x1c] sm:$0xf]
    %v336 = vld [vmem:[#allocation9 + $0x20] sm:$0xf]
    %v337 = vld [vmem:[#allocation9 + $0x24] sm:$0xf]
    %v338 = vld [vmem:[#allocation9 + $0x28] sm:$0xf]
    %v339 = vld [vmem:[#allocation9 + $0x2c] sm:$0xf]
    %v340 = vld [vmem:[#allocation9 + $0x30] sm:$0xf]
    %v341 = vld [vmem:[#allocation9 + $0x34] sm:$0xf]
    %v342 = vld [vmem:[#allocation9 + $0x38] sm:$0xf]
    %v343 = vld [vmem:[#allocation9 + $0x3c] sm:$0xf]
    %v344 = vld [vmem:[%s6] sm:$0x1]
    %v346 = vlaneseq
    %v347 = vshrl.u32 %v346, 7
    %v348 = vsub.s32 0, %v347
    %v349 = vrot.slane %v344, %v348
    %v367 = vunpack.c.l.b16 %v328
    %v368 = vunpack.c.l.b16 %v329
    %v369 = vunpack.c.l.b16 %v330
    %v370 = vunpack.c.l.b16 %v331
    %v371 = vunpack.c.l.b16 %v332
    %v372 = vunpack.c.l.b16 %v333
    %v373 = vunpack.c.l.b16 %v334
    %v374 = vunpack.c.l.b16 %v335
    %v375 = vunpack.c.l.b16 %v336
    %v376 = vunpack.c.l.b16 %v337
    %v377 = vunpack.c.l.b16 %v338
    %v378 = vunpack.c.l.b16 %v339
    %v379 = vunpack.c.l.b16 %v340
    %v380 = vunpack.c.l.b16 %v341
    %v381 = vunpack.c.l.b16 %v342
    %v382 = vunpack.c.l.b16 %v343
    %v383 = vpack.c.b16 %v368, %v367
    %v384 = vpack.c.b16 %v370, %v369
    %v385 = vpack.c.b16 %v372, %v371
    %v386 = vpack.c.b16 %v374, %v373
    %v387 = vpack.c.b16 %v376, %v375
    %v388 = vpack.c.b16 %v378, %v377
    %v389 = vpack.c.b16 %v380, %v379
    %v390 = vpack.c.b16 %v382, %v381
    %399 = vmatprep.subr.bf16.mxu0 0
    %400 = vmatpush1.bf16.msra.mxu0 %v390
    %401 = vmatprep.subr.bf16.mxu0 0
    %402 = vmatpush1.bf16.msra.mxu0 %v389
    %403 = vmatprep.subr.bf16.mxu0 0
    %404 = vmatpush1.bf16.msra.mxu0 %v388
    %405 = vmatprep.subr.bf16.mxu0 0
    %406 = vmatpush1.bf16.msra.mxu0 %v387
    %407 = vmatprep.subr.bf16.mxu0 0
    %408 = vmatpush1.bf16.msra.mxu0 %v386
    %409 = vmatprep.subr.bf16.mxu0 0
    %410 = vmatpush1.bf16.msra.mxu0 %v385
    %411 = vmatprep.subr.bf16.mxu0 0
    %412 = vmatpush1.bf16.msra.mxu0 %v384
    %413 = vmatprep.subr.bf16.mxu0 0
    %414 = vmatpush1.bf16.msra.mxu0 %v383
    %415 = vmatprep.subr.bf16.mxu0 0
    %416 = vmatpush2.bf16.msra.mxu0 0
    %417 = vmatprep.subr.bf16.mxu0 0
    %418 = vmatpush2.bf16.msra.mxu0 0
    %419 = vmatprep.subr.bf16.mxu0 0
    %420 = vmatpush2.bf16.msra.mxu0 0
    %421 = vmatprep.subr.bf16.mxu0 0
    %422 = vmatpush2.bf16.msra.mxu0 0
    %423 = vmatprep.subr.bf16.mxu0 0
    %424 = vmatpush2.bf16.msra.mxu0 0
    %425 = vmatprep.subr.bf16.mxu0 0
    %426 = vmatpush2.bf16.msra.mxu0 0
    %427 = vmatprep.subr.bf16.mxu0 0
    %428 = vmatpush2.bf16.msra.mxu0 0
    %429 = vmatprep.subr.bf16.mxu0 0
    %430 = vmatpush2.bf16.msra.mxu0 0
    %431 = vmatprep.mubr.bf16.mxu0 0
    %432 = vmatmul.mubr.bf16.gmra.mxu0 %v327
    %v433 = vpop.f32.mrf.mxu0
    %v434 = vadd.f32 %v349, %v433
    %v435 = vpop.f32.mrf.mxu0
    %v436 = vpop.f32.mrf.mxu0
    %v437 = vadd.f32 %v349, %v436
    %v438 = vpop.f32.mrf.mxu0
    %439 = vdwg.mxu0
    %v440 = vmax.f32 %v434, 0.0
    %v441 = vmax.f32 %v437, 0.0
    %v442 = vld [vmem:[%s7] sm:$0x1]
    %v443 = vpack.c.bf16 %v441, %v440
    %s444 = sld [smem:[#allocation2]]
    %v445 = vstv %s444
    %446 = vmatprep.subr.bf16.mxu0 0
    %447 = vmatpush1.bf16.xpose.msra.mxu0 0
    %448 = vmatprep.subr.bf16.mxu0 0
    %449 = vmatpush1.bf16.xpose.msra.mxu0 0
    %450 = vmatprep.subr.bf16.mxu0 0
    %451 = vmatpush1.bf16.xpose.msra.mxu0 0
    %452 = vmatprep.subr.bf16.mxu0 0
    %453 = vmatpush1.bf16.xpose.msra.mxu0 0
    %454 = vmatprep.subr.bf16.mxu0 0
    %455 = vmatpush1.bf16.xpose.msra.mxu0 0
    %456 = vmatprep.subr.bf16.mxu0 0
    %457 = vmatpush1.bf16.xpose.msra.mxu0 0
    %458 = vmatprep.subr.bf16.mxu0 0
    %459 = vmatpush1.bf16.xpose.msra.mxu0 0
    %460 = vmatprep.subr.bf16.mxu0 0
    %461 = vmatpush1.bf16.xpose.msra.mxu0 %v443
    %462 = vmatprep.subr.bf16.mxu0 0
    %463 = vmatpush2.bf16.xpose.msra.mxu0 0
    %464 = vmatprep.subr.bf16.mxu0 0
    %465 = vmatpush2.bf16.xpose.msra.mxu0 0
    %466 = vmatprep.subr.bf16.mxu0 0
    %467 = vmatpush2.bf16.xpose.msra.mxu0 0
    %468 = vmatprep.subr.bf16.mxu0 0
    %469 = vmatpush2.bf16.xpose.msra.mxu0 0
    %470 = vmatprep.subr.bf16.mxu0 0
    %471 = vmatpush2.bf16.xpose.msra.mxu0 0
    %472 = vmatprep.subr.bf16.mxu0 0
    %473 = vmatpush2.bf16.xpose.msra.mxu0 0
    %474 = vmatprep.subr.bf16.mxu0 0
    %475 = vmatpush2.bf16.xpose.msra.mxu0 0
    %476 = vmatprep.subr.bf16.mxu0 0
    %477 = vmatpush2.bf16.xpose.msra.mxu0 0
    %478 = vmatprep.mubr.bf16.mxu0 0
    %479 = vmatmul.mubr.bf16.gmra.mxu0 %v442
    %v480 = vpop.f32.mrf.mxu0
    %v481 = vadd.f32 %v445, %v480
    %v482 = vpop.f32.mrf.mxu0
    %v483 = vpop.f32.mrf.mxu0
    %v484 = vpop.f32.mrf.mxu0
    %485 = vdwg.mxu0
    %vm486 = vcmask 122880
    %487 = vst.msk [vmem:[#allocation11] sm:$0x1] %vm486, %v481
    // Predicated region
    $region54: #{tpu_custom_call.1} parent=1 // pred_check
      _
    $region55: #{tpu_custom_call.1} parent=1 // pred_check_branch
      %489 = sbr.rel (0) target = $region57
    $region56: #{tpu_custom_call.1} parent=1 // pred_region
      %s491 = ssub.s32 16, 16
      %492 = vsyncadd [#allocation5], %s491
      %s494 = sshll.u32 [#allocation11], 4
      %s495 = int_to_ptr.vmem [resolvable:$true] %s494
      %497 = dma.vmem_to_hbm [thread:$0]  %s495, 16, %s9, [#allocation5]
    $region57: #{tpu_custom_call.1} parent=1 // pred_fallthru
      _
    // Predicated region
    $region58: #{tpu_custom_call.1} parent=1 // pred_check
      _
    $region59: #{tpu_custom_call.1} parent=1 // pred_check_branch
      %499 = sbr.rel (0) target = $region61
    $region60: #{tpu_custom_call.1} parent=1 // pred_region
      %500 = dma.done [#allocation5], 16
    $region61: #{tpu_custom_call.1} parent=1 // pred_fallthru
      _
    %501 = vsyncpa [#allocation4], 1
    %502 = vsyncpa [#allocation7], 1
    %503 = vsyncpa [#allocation10], 1
    %504 = vsyncpa [#allocation5], 1

</llo_original>
